<compile_context>
chip_gen: v7x
topology: tpu7x:2x2x1
jax: 0.10.0
libtpu: 0.0.40
codegen_flags: <defaults>
</compile_context>

<pallas_src>
import jax
import jax.numpy as jnp
from jax.experimental import pallas as pl
from jax.experimental.pallas import tpu as pltpu


def _round_up(v, m):
    return ((v + m - 1) // m) * m


# ---------------------------------------------------------------------------
# Elementwise add kernel:  m = x + y   (single HBM pass, VPU only)
# ---------------------------------------------------------------------------
def _add_kernel(x_ref, y_ref, o_ref):
    o_ref[...] = x_ref[...] + y_ref[...]


def _pallas_add(x, y):
    """x + y on (rows, cols) arrays whose dims are multiples of (8, 128)."""
    n_rows, n_cols = x.shape
    # Row blocks with the full (lane-dense) last dim; shrink rows only if the
    # double-buffered footprint of the 3 streams would get uncomfortably big.
    tr = 128 if (6 * 128 * n_cols * x.dtype.itemsize) <= (24 << 20) else 8
    return pl.pallas_call(
        _add_kernel,
        out_shape=jax.ShapeDtypeStruct((n_rows, n_cols), x.dtype),
        grid_spec=pltpu.PrefetchScalarGridSpec(
            num_scalar_prefetch=0,
            grid=(n_rows // tr,),
            in_specs=[
                pl.BlockSpec((tr, n_cols), lambda i: (i, 0)),
                pl.BlockSpec((tr, n_cols), lambda i: (i, 0)),
            ],
            out_specs=pl.BlockSpec((tr, n_cols), lambda i: (i, 0)),
        ),
        compiler_params=pltpu.CompilerParams(
            dimension_semantics=("parallel",),
        ),
    )(x, y)


# ---------------------------------------------------------------------------
# Matmul kernels:  out = m @ m   (K-reduction is the last grid axis)
# ---------------------------------------------------------------------------
def _matmul_kernel_f32(lhs_ref, rhs_ref, o_ref):
    # f32 output: accumulate directly into the resident output block.
    @pl.when(pl.program_id(2) == 0)
    def _():
        o_ref[...] = jnp.zeros_like(o_ref)

    o_ref[...] += jnp.dot(lhs_ref[...], rhs_ref[...],
                          preferred_element_type=jnp.float32)


def _matmul_kernel_acc(lhs_ref, rhs_ref, o_ref, acc_ref):
    # Non-f32 output: keep an f32 VMEM accumulator, cast once at the end.
    @pl.when(pl.program_id(2) == 0)
    def _():
        acc_ref[...] = jnp.zeros_like(acc_ref)

    acc_ref[...] += jnp.dot(lhs_ref[...], rhs_ref[...],
                            preferred_element_type=jnp.float32)

    @pl.when(pl.program_id(2) == pl.num_programs(2) - 1)
    def _():
        o_ref[...] = acc_ref[...].astype(o_ref.dtype)


def add_matmul(x, y, *, target_tile=512):
    """Computes (x + y) @ (x + y) with Pallas TPU kernels."""
    assert x.shape == y.shape and x.dtype == y.dtype
    assert x.ndim == 2 and x.shape[0] == x.shape[1], "m @ m needs a square matrix"
    n = x.shape[0]

    # ---- pick tiles first, then pad n to a multiple of the tile -------------
    n128 = _round_up(n, 128)
    if n128 <= target_tile:
        # Whole (padded) matrix fits a single tile per dim.  Split M into two
        # blocks so both TensorCores get work on v7x (tm stays a multiple of 8
        # and divides n_pad since n_pad is a multiple of 128).
        n_pad = n128
        tn = tk = n_pad
        tm = n_pad // 2 if n_pad >= 256 else n_pad
    else:
        n_pad = _round_up(n, target_tile)
        tm = tn = tk = target_tile

    # Zero padding is exact: padded rows/cols of m are zero, so they contribute
    # nothing to the top-left n x n block of m @ m.
    if n_pad != n:
        pad = n_pad - n
        x_p = jnp.pad(x, ((0, pad), (0, pad)))
        y_p = jnp.pad(y, ((0, pad), (0, pad)))
    else:
        x_p, y_p = x, y

    # ---- precompute m = x + y once (single HBM pass) ------------------------
    m = _pallas_add(x_p, y_p)

    grid = (n_pad // tm, n_pad // tn, n_pad // tk)

    direct_f32 = x.dtype == jnp.float32
    kernel = _matmul_kernel_f32 if direct_f32 else _matmul_kernel_acc
    scratch = [] if direct_f32 else [pltpu.VMEM((tm, tn), jnp.float32)]

    # Explicit scoped-VMEM budget with headroom; ~6 MiB actual footprint at
    # 512-tiles f32, and the 32-48 MiB cap stays safe on v7x's 64 MiB VMEM.
    in_bytes = x.dtype.itemsize
    footprint = (2 * (tm * tk + tk * tn) * in_bytes        # double-buffered inputs
                 + 2 * tm * tn * in_bytes                  # output windows
                 + (0 if direct_f32 else tm * tn * 4))     # f32 accumulator
    vmem_limit = min(max(2 * footprint, 32 << 20), 48 << 20)

    out = pl.pallas_call(
        kernel,
        out_shape=jax.ShapeDtypeStruct((n_pad, n_pad), x.dtype),
        grid_spec=pltpu.PrefetchScalarGridSpec(
            num_scalar_prefetch=0,
            grid=grid,
            in_specs=[
                pl.BlockSpec((tm, tk), lambda i, j, k: (i, k)),  # m -> LHS tile
                pl.BlockSpec((tk, tn), lambda i, j, k: (k, j)),  # m -> RHS tile
            ],
            out_specs=pl.BlockSpec((tm, tn), lambda i, j, k: (i, j)),
            scratch_shapes=scratch,
        ),
        compiler_params=pltpu.CompilerParams(
            # i, j shard across TensorCores (matters on v7x); K is a reduction.
            dimension_semantics=("parallel", "parallel", "arbitrary"),
            vmem_limit_bytes=vmem_limit,
        ),
    )(m, m)

    if n_pad != n:
        out = out[:n, :n]
    return out


if __name__ == "__main__":
    key = jax.random.PRNGKey(0)
    kx, ky = jax.random.split(key)
    shape = (256, 256)  # small square matrix: m = x + y, then m @ m
    x = jax.random.normal(kx, shape, dtype=jnp.float32)
    y = jax.random.normal(ky, shape, dtype=jnp.float32)

    out = add_matmul(x, y)
    jax.block_until_ready(out)

    m = x + y
    ref = jnp.matmul(m, m)
    assert out.shape == ref.shape and out.dtype == ref.dtype
    assert jnp.allclose(out, ref, atol=1e-2, rtol=1e-2), (
        float(jnp.max(jnp.abs(out - ref)))
    )
    print("KERNEL_OK")
</pallas_src>

<mosaic_0001>
module attributes {stable_mosaic.version = 11 : i64} {
  func.func @_add_kernel(%arg0: i32, %arg1: memref<128x256xf32, #tpu.memory_space<vmem>>, %arg2: memref<128x256xf32, #tpu.memory_space<vmem>>, %arg3: memref<128x256xf32, #tpu.memory_space<vmem>>) attributes {dimension_semantics = [#tpu.dimension_semantics<parallel>], iteration_bounds = array<i64: 2>, scalar_prefetch = 0 : i64, scratch_operands = 0 : i64, tpu.core_type = #tpu.core_type<tc>, window_params = [{transform_indices = @transform_0, window_bounds = array<i64: 128, 256>}, {transform_indices = @transform_1, window_bounds = array<i64: 128, 256>}, {transform_indices = @transform_2, window_bounds = array<i64: 128, 256>}]} {
    %c0 = arith.constant 0 : index
    %c0_0 = arith.constant 0 : index
    %0 = vector.load %arg1[%c0, %c0_0] : memref<128x256xf32, #tpu.memory_space<vmem>>, vector<128x256xf32>
    %c0_1 = arith.constant 0 : index
    %c0_2 = arith.constant 0 : index
    %1 = vector.load %arg2[%c0_1, %c0_2] : memref<128x256xf32, #tpu.memory_space<vmem>>, vector<128x256xf32>
    %2 = arith.addf %0, %1 : vector<128x256xf32>
    %c0_3 = arith.constant 0 : index
    %c0_4 = arith.constant 0 : index
    %3 = vector.load %arg3[%c0_3, %c0_4] : memref<128x256xf32, #tpu.memory_space<vmem>>, vector<128x256xf32>
    tpu.vector_store %arg3[%c0_3, %c0_4], %2 {strides = array<i32>} : memref<128x256xf32, #tpu.memory_space<vmem>>, vector<128x256xf32>,
    return
  }
  func.func @transform_0(%arg0: i32) -> (i32, i32) {
    %c0_i32 = arith.constant 0 : i32
    %c0_i32_0 = arith.constant 0 : i32
    return %arg0, %c0_i32 : i32, i32
  }
  func.func @transform_1(%arg0: i32) -> (i32, i32) {
    %c0_i32 = arith.constant 0 : i32
    %c0_i32_0 = arith.constant 0 : i32
    return %arg0, %c0_i32 : i32, i32
  }
  func.func @transform_2(%arg0: i32) -> (i32, i32) {
    %c0_i32 = arith.constant 0 : i32
    %c0_i32_0 = arith.constant 0 : i32
    return %arg0, %c0_i32 : i32, i32
  }
}

</mosaic_0001>

<llo_original>
// kernel: tpu_custom_call.1
$region0: #{tpu_custom_call.1}
  #allocation0 [shape = 'u32[]', space=smem, size = 0x4, offset = 0x4, fixed_abs, tag = 'smem constant byte address 0x4 - core index']
  #allocation1 [shape = 'u32[144,128]{1,0:T(1,128)}', space=vmem, size = 0x12000, scoped, tag = 'internal scratch']
  %s0 = inlined_call_operand.hbm [shape: f32[256,256], index: 0, kind: input, shape index: {}]
  %s1 = inlined_call_operand.hbm [shape: f32[256,256], index: 1, kind: input, shape index: {}]
  %s2 = inlined_call_operand.hbm [shape: f32[256,256], index: 2, kind: output, shape index: {}]
  %s3 = sld [smem:[#allocation0]]
  $region49: #{tpu_custom_call.1} parent=0
    _
  %s5 = ssub.s32 1, %s3
  %s6 = scalar_select 0, %s5, %s3
  $region1: #{tpu_custom_call.1} parent=0
    #allocation2 [shape = 'u8[262144]{0}', space=vmem, size = 0x40000, scoped, tag = 'input window, operand 0']
    #allocation3 [shape = 's32[2]{0}', space=sflag, size = 0x8, scoped, tag = 'scoped memory for tpu_custom_call.1']
    #allocation4 [shape = 's32[2]{0}', space=sflag, size = 0x8, scoped, tag = 'scoped memory for tpu_custom_call.1']
    #allocation5 [shape = 'u8[262144]{0}', space=vmem, size = 0x40000, scoped, tag = 'input window, operand 1']
    #allocation6 [shape = 's32[2]{0}', space=sflag, size = 0x8, scoped, tag = 'scoped memory for tpu_custom_call.1']
    #allocation7 [shape = 'u8[262144]{0}', space=vmem, size = 0x40000, scoped, tag = 'output window, operand 0']
    %7 = vsyncpa [#allocation3], 0
    %s8 = scalar_lea.sflag [#allocation3], 1
    %9 = vsyncpa %s8, 0
    %10 = vsyncpa [#allocation6], 0
    %s11 = scalar_lea.sflag [#allocation6], 1
    %12 = vsyncpa %s11, 0
    %13 = vsyncpa [#allocation4], 0
    %s14 = scalar_lea.sflag [#allocation4], 1
    %15 = vsyncpa %s14, 0
    loop: start=0, step=1, limit=4
    $region2: #{tpu_custom_call.1} parent=1 // loop_pre_header
      _
    $region3: #{tpu_custom_call.1} parent=1 // loop_header
      %s17 = sphi 0, %s21
      %p18 = scmp.ge.s32.totalorder %s17, 4
      %s27 = sphi 0, %s29
      %s30 = sphi 0, %s27
      %s31 = sphi 0, %s30
      %s47 = sphi 0, %s31
      %s53 = sphi 0, %s55
      %s56 = sphi 0, %s53
      %s57 = sphi 0, %s56
      %s73 = sphi 0, %s57
      %s79 = sphi 0, %s81
      %s82 = sphi 0, %s79
      %s83 = sphi 0, %s82
      %s99 = sphi 0, %s83
    $region4: #{tpu_custom_call.1} parent=1 // loop_header_branch
      %20 = sbr.rel (%p18) target = $region8
    $region5: #{tpu_custom_call.1} parent=1 // loop_body
      %s22 = ssub.s32 %s17, 1
      %s23 = ssub.s32 %s17, 2
      %s24 = sadd.s32 %s17, 1
      %s25 = ssub.s32 %s17, %s24
      %p26 = scmp.eq.s32.totalorder %s25, 0
      %s28 = sadd.s32 %s27, 1
      %s29 = scalar_select %p26, %s27, %s28
      %p32 = pneg %p26
      %p33 = scmp.eq.s32.totalorder %s17, 1
      %p34 = por %p32, %p33
      %p35 = scmp.ne.s32.totalorder %s27, %s30
      %p36 = scmp.eq.s32.totalorder %s17, 0
      %p37 = por %p35, %p36
      %p38 = scmp.ne.s32.totalorder %s27, %s30
      %p39 = scmp.eq.s32.totalorder %s22, 1
      %p40 = por %p38, %p39
      %p41 = scmp.ne.s32.totalorder %s30, %s31
      %p42 = scmp.eq.s32.totalorder %s22, 0
      %p43 = por %p41, %p42
      %p44 = scmp.ne.s32.totalorder %s30, %s31
      %p45 = scmp.eq.s32.totalorder %s23, 1
      %p46 = por %p44, %p45
      %p48 = scmp.ne.s32.totalorder %s31, %s47
      %p49 = scmp.eq.s32.totalorder %s23, 0
      %p50 = por %p48, %p49
      %s51 = ssub.s32 %s17, %s24
      %p52 = scmp.eq.s32.totalorder %s51, 0
      %s54 = sadd.s32 %s53, 1
      %s55 = scalar_select %p52, %s53, %s54
      %p58 = pneg %p52
      %p59 = scmp.eq.s32.totalorder %s17, 1
      %p60 = por %p58, %p59
      %p61 = scmp.ne.s32.totalorder %s53, %s56
      %p62 = scmp.eq.s32.totalorder %s17, 0
      %p63 = por %p61, %p62
      %p64 = scmp.ne.s32.totalorder %s53, %s56
      %p65 = scmp.eq.s32.totalorder %s22, 1
      %p66 = por %p64, %p65
      %p67 = scmp.ne.s32.totalorder %s56, %s57
      %p68 = scmp.eq.s32.totalorder %s22, 0
      %p69 = por %p67, %p68
      %p70 = scmp.ne.s32.totalorder %s56, %s57
      %p71 = scmp.eq.s32.totalorder %s23, 1
      %p72 = por %p70, %p71
      %p74 = scmp.ne.s32.totalorder %s57, %s73
      %p75 = scmp.eq.s32.totalorder %s23, 0
      %p76 = por %p74, %p75
      %s77 = ssub.s32 %s17, %s24
      %p78 = scmp.eq.s32.totalorder %s77, 0
      %s80 = sadd.s32 %s79, 1
      %s81 = scalar_select %p78, %s79, %s80
      %p84 = pneg %p78
      %p85 = scmp.eq.s32.totalorder %s17, 1
      %p86 = por %p84, %p85
      %p87 = scmp.ne.s32.totalorder %s79, %s82
      %p88 = scmp.eq.s32.totalorder %s17, 0
      %p89 = por %p87, %p88
      %p90 = scmp.ne.s32.totalorder %s79, %s82
      %p91 = scmp.eq.s32.totalorder %s22, 1
      %p92 = por %p90, %p91
      %p93 = scmp.ne.s32.totalorder %s82, %s83
      %p94 = scmp.eq.s32.totalorder %s22, 0
      %p95 = por %p93, %p94
      %p96 = scmp.ne.s32.totalorder %s82, %s83
      %p97 = scmp.eq.s32.totalorder %s23, 1
      %p98 = por %p96, %p97
      %p100 = scmp.ne.s32.totalorder %s83, %s99
      %p101 = scmp.eq.s32.totalorder %s23, 0
      %p102 = por %p100, %p101
      %p103 = scmp.le.s32.totalorder 1, %s17
      %p104 = scmp.lt.s32.totalorder %s17, 3
      %p105 = pnand %p103, %p104
      %p106 = pneg %p105
      // Predicated region
      $region9: #{tpu_custom_call.1} parent=5 // pred_check
        _
      $region10: #{tpu_custom_call.1} parent=5 // pred_check_branch
        %108 = sbr.rel (%p105) target = $region12
      $region11: #{tpu_custom_call.1} parent=5 // pred_region
        %s109 = ssub.s32 %s17, 1
      $region12: #{tpu_custom_call.1} parent=5 // pred_fallthru
        _
      %p110 = scmp.lt.s32.totalorder %s17, 2
      // Predicated region
      $region13: #{tpu_custom_call.1} parent=5 // pred_check
        %p111 = pneg %p110
      $region14: #{tpu_custom_call.1} parent=5 // pred_check_branch
        %113 = sbr.rel (%p111) target = $region16
      $region15: #{tpu_custom_call.1} parent=5 // pred_region
        // Predicated region
        $region17: #{tpu_custom_call.1} parent=15 // pred_check
          %p114 = pneg %p37
        $region18: #{tpu_custom_call.1} parent=15 // pred_check_branch
          %116 = sbr.rel (%p114) target = $region20
        $region19: #{tpu_custom_call.1} parent=15 // pred_region
          %s117 = sand.u32 %s27, 1
          %s118 = scalar_lea.sflag [#allocation3], %s117
          %s119 = sand.u32 %s27, 1
          %s120 = smul.addr %s119, 256
          %s121 = scalar_lea.vmem [#allocation2], %s120
          %s122 = smul.u32 16, %s17
          %s124 = ssub.s32 4096, 4096
          %125 = vsyncadd %s118, %s124
          %s126 = smul.addr %s122, 2
          %s127 = smul.addr %s126, 128
          %s128 = scalar_lea.hbm %s0, %s127
          %s129 = sshll.u32 %s121, 4
          %s130 = int_to_ptr.vmem [resolvable:$true] %s129
          %135 = dma.hbm_to_vmem [thread:$0]  %s128, 4096, %s130, %s118, 256, 256, 16
        $region20: #{tpu_custom_call.1} parent=15 // pred_fallthru
          _
        // Predicated region
        $region21: #{tpu_custom_call.1} parent=15 // pred_check
          %p136 = pneg %p63
        $region22: #{tpu_custom_call.1} parent=15 // pred_check_branch
          %138 = sbr.rel (%p136) target = $region24
        $region23: #{tpu_custom_call.1} parent=15 // pred_region
          %s139 = sand.u32 %s53, 1
          %s140 = scalar_lea.sflag [#allocation6], %s139
          %s141 = sand.u32 %s53, 1
          %s142 = smul.addr %s141, 256
          %s143 = scalar_lea.vmem [#allocation5], %s142
          %s144 = smul.u32 16, %s17
          %s146 = ssub.s32 4096, 4096
          %147 = vsyncadd %s140, %s146
          %s148 = smul.addr %s144, 2
          %s149 = smul.addr %s148, 128
          %s150 = scalar_lea.hbm %s1, %s149
          %s151 = sshll.u32 %s143, 4
          %s152 = int_to_ptr.vmem [resolvable:$true] %s151
          %157 = dma.hbm_to_vmem [thread:$0]  %s150, 4096, %s152, %s140, 256, 256, 16
        $region24: #{tpu_custom_call.1} parent=15 // pred_fallthru
          _
      $region16: #{tpu_custom_call.1} parent=5 // pred_fallthru
        _
      %p158 = scmp.le.s32.totalorder 1, %s17
      %p159 = scmp.lt.s32.totalorder %s17, 3
      %p160 = pnand %p158, %p159
      %p161 = pneg %p160
      // Predicated region
      $region25: #{tpu_custom_call.1} parent=5 // pred_check
        _
      $region26: #{tpu_custom_call.1} parent=5 // pred_check_branch
        %163 = sbr.rel (%p160) target = $region28
      $region27: #{tpu_custom_call.1} parent=5 // pred_region
        %s164 = ssub.s32 %s17, 1
        %s165 = sand.u32 %s30, 1
        %s166 = scalar_lea.sflag [#allocation3], %s165
        %s167 = sand.u32 %s30, 1
        %s168 = smul.addr %s167, 256
        %s169 = scalar_lea.vmem [#allocation2], %s168
        // Predicated region
        $region29: #{tpu_custom_call.1} parent=27 // pred_check
          %p170 = pneg %p43
        $region30: #{tpu_custom_call.1} parent=27 // pred_check_branch
          %172 = sbr.rel (%p170) target = $region32
        $region31: #{tpu_custom_call.1} parent=27 // pred_region
          %173 = dma.done %s166, 4096
        $region32: #{tpu_custom_call.1} parent=27 // pred_fallthru
          _
        %s174 = sand.u32 %s56, 1
        %s175 = scalar_lea.sflag [#allocation6], %s174
        %s176 = sand.u32 %s56, 1
        %s177 = smul.addr %s176, 256
        %s178 = scalar_lea.vmem [#allocation5], %s177
        // Predicated region
        $region33: #{tpu_custom_call.1} parent=27 // pred_check
          %p179 = pneg %p69
        $region34: #{tpu_custom_call.1} parent=27 // pred_check_branch
          %181 = sbr.rel (%p179) target = $region36
        $region35: #{tpu_custom_call.1} parent=27 // pred_region
          %182 = dma.done %s175, 4096
        $region36: #{tpu_custom_call.1} parent=27 // pred_fallthru
          _
        %s183 = sand.u32 %s30, 1
        %s184 = scalar_lea.sflag [#allocation3], %s183
        %s185 = sand.u32 %s30, 1
        %s186 = smul.addr %s185, 256
        %s187 = scalar_lea.vmem [#allocation2], %s186
        %p188 = pneg %p43
        %p189 = pneg %p40
        %s190 = sand.u32 %s56, 1
        %s191 = scalar_lea.sflag [#allocation6], %s190
        %s192 = sand.u32 %s56, 1
        %s193 = smul.addr %s192, 256
        %s194 = scalar_lea.vmem [#allocation5], %s193
        %p195 = pneg %p69
        %p196 = pneg %p66
        %p197 = pneg %p95
        %p198 = pneg %p92
        %s199 = sand.u32 %s82, 1
        %s200 = scalar_lea.sflag [#allocation4], %s199
        %s201 = sand.u32 %s82, 1
        %s202 = smul.addr %s201, 256
        %s203 = scalar_lea.vmem [#allocation7], %s202
        %s204 = smul.u32 16, %s22
        %s205 = smul.u32 16, %s22
        %s206 = smul.u32 16, %s22
        %v207 = vld [vmem:[%s169] sm:$0xff]
        %v208 = vld [vmem:[%s169 + $0x8] sm:$0xff]
        %v209 = vld [vmem:[%s169 + $0x10] sm:$0xff]
        %v210 = vld [vmem:[%s169 + $0x18] sm:$0xff]
        %v211 = vld [vmem:[%s169 + $0x20] sm:$0xff]
        %v212 = vld [vmem:[%s169 + $0x28] sm:$0xff]
        %v213 = vld [vmem:[%s169 + $0x30] sm:$0xff]
        %v214 = vld [vmem:[%s169 + $0x38] sm:$0xff]
        %v215 = vld [vmem:[%s169 + $0x40] sm:$0xff]
        %v216 = vld [vmem:[%s169 + $0x48] sm:$0xff]
        %v217 = vld [vmem:[%s169 + $0x50] sm:$0xff]
        %v218 = vld [vmem:[%s169 + $0x58] sm:$0xff]
        %v219 = vld [vmem:[%s169 + $0x60] sm:$0xff]
        %v220 = vld [vmem:[%s169 + $0x68] sm:$0xff]
        %v221 = vld [vmem:[%s169 + $0x70] sm:$0xff]
        %v222 = vld [vmem:[%s169 + $0x78] sm:$0xff]
        %v223 = vld [vmem:[%s169 + $0x80] sm:$0xff]
        %v224 = vld [vmem:[%s169 + $0x88] sm:$0xff]
        %v225 = vld [vmem:[%s169 + $0x90] sm:$0xff]
        %v226 = vld [vmem:[%s169 + $0x98] sm:$0xff]
        %v227 = vld [vmem:[%s169 + $0xa0] sm:$0xff]
        %v228 = vld [vmem:[%s169 + $0xa8] sm:$0xff]
        %v229 = vld [vmem:[%s169 + $0xb0] sm:$0xff]
        %v230 = vld [vmem:[%s169 + $0xb8] sm:$0xff]
        %v231 = vld [vmem:[%s169 + $0xc0] sm:$0xff]
        %v232 = vld [vmem:[%s169 + $0xc8] sm:$0xff]
        %v233 = vld [vmem:[%s169 + $0xd0] sm:$0xff]
        %v234 = vld [vmem:[%s169 + $0xd8] sm:$0xff]
        %v235 = vld [vmem:[%s169 + $0xe0] sm:$0xff]
        %v236 = vld [vmem:[%s169 + $0xe8] sm:$0xff]
        %v237 = vld [vmem:[%s169 + $0xf0] sm:$0xff]
        %v238 = vld [vmem:[%s169 + $0xf8] sm:$0xff]
        %v239 = vld [vmem:[%s178] sm:$0xff]
        %v240 = vld [vmem:[%s178 + $0x8] sm:$0xff]
        %v241 = vld [vmem:[%s178 + $0x10] sm:$0xff]
        %v242 = vld [vmem:[%s178 + $0x18] sm:$0xff]
        %v243 = vld [vmem:[%s178 + $0x20] sm:$0xff]
        %v244 = vld [vmem:[%s178 + $0x28] sm:$0xff]
        %v245 = vld [vmem:[%s178 + $0x30] sm:$0xff]
        %v246 = vld [vmem:[%s178 + $0x38] sm:$0xff]
        %v247 = vld [vmem:[%s178 + $0x40] sm:$0xff]
        %v248 = vld [vmem:[%s178 + $0x48] sm:$0xff]
        %v249 = vld [vmem:[%s178 + $0x50] sm:$0xff]
        %v250 = vld [vmem:[%s178 + $0x58] sm:$0xff]
        %v251 = vld [vmem:[%s178 + $0x60] sm:$0xff]
        %v252 = vld [vmem:[%s178 + $0x68] sm:$0xff]
        %v253 = vld [vmem:[%s178 + $0x70] sm:$0xff]
        %v254 = vld [vmem:[%s178 + $0x78] sm:$0xff]
        %v255 = vld [vmem:[%s178 + $0x80] sm:$0xff]
        %v256 = vld [vmem:[%s178 + $0x88] sm:$0xff]
        %v257 = vld [vmem:[%s178 + $0x90] sm:$0xff]
        %v258 = vld [vmem:[%s178 + $0x98] sm:$0xff]
        %v259 = vld [vmem:[%s178 + $0xa0] sm:$0xff]
        %v260 = vld [vmem:[%s178 + $0xa8] sm:$0xff]
        %v261 = vld [vmem:[%s178 + $0xb0] sm:$0xff]
        %v262 = vld [vmem:[%s178 + $0xb8] sm:$0xff]
        %v263 = vld [vmem:[%s178 + $0xc0] sm:$0xff]
        %v264 = vld [vmem:[%s178 + $0xc8] sm:$0xff]
        %v265 = vld [vmem:[%s178 + $0xd0] sm:$0xff]
        %v266 = vld [vmem:[%s178 + $0xd8] sm:$0xff]
        %v267 = vld [vmem:[%s178 + $0xe0] sm:$0xff]
        %v268 = vld [vmem:[%s178 + $0xe8] sm:$0xff]
        %v269 = vld [vmem:[%s178 + $0xf0] sm:$0xff]
        %v270 = vld [vmem:[%s178 + $0xf8] sm:$0xff]
        %v271 = vadd.f32 %v207, %v239
        %v272 = vadd.f32 %v208, %v240
        %v273 = vadd.f32 %v209, %v241
        %v274 = vadd.f32 %v210, %v242
        %v275 = vadd.f32 %v211, %v243
        %v276 = vadd.f32 %v212, %v244
        %v277 = vadd.f32 %v213, %v245
        %v278 = vadd.f32 %v214, %v246
        %v279 = vadd.f32 %v215, %v247
        %v280 = vadd.f32 %v216, %v248
        %v281 = vadd.f32 %v217, %v249
        %v282 = vadd.f32 %v218, %v250
        %v283 = vadd.f32 %v219, %v251
        %v284 = vadd.f32 %v220, %v252
        %v285 = vadd.f32 %v221, %v253
        %v286 = vadd.f32 %v222, %v254
        %v287 = vadd.f32 %v223, %v255
        %v288 = vadd.f32 %v224, %v256
        %v289 = vadd.f32 %v225, %v257
        %v290 = vadd.f32 %v226, %v258
        %v291 = vadd.f32 %v227, %v259
        %v292 = vadd.f32 %v228, %v260
        %v293 = vadd.f32 %v229, %v261
        %v294 = vadd.f32 %v230, %v262
        %v295 = vadd.f32 %v231, %v263
        %v296 = vadd.f32 %v232, %v264
        %v297 = vadd.f32 %v233, %v265
        %v298 = vadd.f32 %v234, %v266
        %v299 = vadd.f32 %v235, %v267
        %v300 = vadd.f32 %v236, %v268
        %v301 = vadd.f32 %v237, %v269
        %v302 = vadd.f32 %v238, %v270
        %303 = vst [vmem:[%s203] sm:$0xff] %v271
        %304 = vst [vmem:[%s203 + $0x8] sm:$0xff] %v272
        %305 = vst [vmem:[%s203 + $0x10] sm:$0xff] %v273
        %306 = vst [vmem:[%s203 + $0x18] sm:$0xff] %v274
        %307 = vst [vmem:[%s203 + $0x20] sm:$0xff] %v275
        %308 = vst [vmem:[%s203 + $0x28] sm:$0xff] %v276
        %309 = vst [vmem:[%s203 + $0x30] sm:$0xff] %v277
        %310 = vst [vmem:[%s203 + $0x38] sm:$0xff] %v278
        %311 = vst [vmem:[%s203 + $0x40] sm:$0xff] %v279
        %312 = vst [vmem:[%s203 + $0x48] sm:$0xff] %v280
        %313 = vst [vmem:[%s203 + $0x50] sm:$0xff] %v281
        %314 = vst [vmem:[%s203 + $0x58] sm:$0xff] %v282
        %315 = vst [vmem:[%s203 + $0x60] sm:$0xff] %v283
        %316 = vst [vmem:[%s203 + $0x68] sm:$0xff] %v284
        %317 = vst [vmem:[%s203 + $0x70] sm:$0xff] %v285
        %318 = vst [vmem:[%s203 + $0x78] sm:$0xff] %v286
        %319 = vst [vmem:[%s203 + $0x80] sm:$0xff] %v287
        %320 = vst [vmem:[%s203 + $0x88] sm:$0xff] %v288
        %321 = vst [vmem:[%s203 + $0x90] sm:$0xff] %v289
        %322 = vst [vmem:[%s203 + $0x98] sm:$0xff] %v290
        %323 = vst [vmem:[%s203 + $0xa0] sm:$0xff] %v291
        %324 = vst [vmem:[%s203 + $0xa8] sm:$0xff] %v292
        %325 = vst [vmem:[%s203 + $0xb0] sm:$0xff] %v293
        %326 = vst [vmem:[%s203 + $0xb8] sm:$0xff] %v294
        %327 = vst [vmem:[%s203 + $0xc0] sm:$0xff] %v295
        %328 = vst [vmem:[%s203 + $0xc8] sm:$0xff] %v296
        %329 = vst [vmem:[%s203 + $0xd0] sm:$0xff] %v297
        %330 = vst [vmem:[%s203 + $0xd8] sm:$0xff] %v298
        %331 = vst [vmem:[%s203 + $0xe0] sm:$0xff] %v299
        %332 = vst [vmem:[%s203 + $0xe8] sm:$0xff] %v300
        %333 = vst [vmem:[%s203 + $0xf0] sm:$0xff] %v301
        %334 = vst [vmem:[%s203 + $0xf8] sm:$0xff] %v302
        %s335 = sand.u32 %s82, 1
        %s336 = scalar_lea.sflag [#allocation4], %s335
        %s337 = sand.u32 %s82, 1
        %s338 = smul.addr %s337, 256
        %s339 = scalar_lea.vmem [#allocation7], %s338
        // Predicated region
        $region37: #{tpu_custom_call.1} parent=27 // pred_check
          %p340 = pneg %p92
        $region38: #{tpu_custom_call.1} parent=27 // pred_check_branch
          %342 = sbr.rel (%p340) target = $region40
        $region39: #{tpu_custom_call.1} parent=27 // pred_region
          %s343 = smul.u32 16, %s22
          %s345 = ssub.s32 4096, 4096
          %346 = vsyncadd %s336, %s345
          %s347 = smul.addr %s343, 2
          %s348 = smul.addr %s347, 128
          %s349 = scalar_lea.hbm %s2, %s348
          %s350 = sshll.u32 %s339, 4
          %s351 = int_to_ptr.vmem [resolvable:$true] %s350
          %356 = dma.vmem_to_hbm [thread:$0]  %s351, 4096, %s349, %s336, 256, 256, 16
        $region40: #{tpu_custom_call.1} parent=27 // pred_fallthru
          _
      $region28: #{tpu_custom_call.1} parent=5 // pred_fallthru
        _
      %p357 = scmp.le.s32.totalorder 2, %s17
      // Predicated region
      $region41: #{tpu_custom_call.1} parent=5 // pred_check
        %p358 = pneg %p357
      $region42: #{tpu_custom_call.1} parent=5 // pred_check_branch
        %360 = sbr.rel (%p358) target = $region44
      $region43: #{tpu_custom_call.1} parent=5 // pred_region
        %s361 = ssub.s32 %s17, 2
        // Predicated region
        $region45: #{tpu_custom_call.1} parent=43 // pred_check
          %p362 = pneg %p98
        $region46: #{tpu_custom_call.1} parent=43 // pred_check_branch
          %364 = sbr.rel (%p362) target = $region48
        $region47: #{tpu_custom_call.1} parent=43 // pred_region
          %s365 = sand.u32 %s83, 1
          %s366 = scalar_lea.sflag [#allocation4], %s365
          %s367 = sand.u32 %s83, 1
          %s368 = smul.addr %s367, 256
          %s369 = scalar_lea.vmem [#allocation7], %s368
          %370 = dma.done %s366, 4096
        $region48: #{tpu_custom_call.1} parent=43 // pred_fallthru
          _
      $region44: #{tpu_custom_call.1} parent=5 // pred_fallthru
        _
    $region6: #{tpu_custom_call.1} parent=1 // loop_footer
      %s21 = sadd.s32 1, %s17
    $region7: #{tpu_custom_call.1} parent=1 // loop_footer_branch
      %16 = sbr.rel target = $region3
    $region8: #{tpu_custom_call.1} parent=1 // loop_exit
      _
    %371 = vsyncpa [#allocation3], 1
    %s372 = scalar_lea.sflag [#allocation3], 1
    %373 = vsyncpa %s372, 1
    %374 = vsyncpa [#allocation6], 1
    %s375 = scalar_lea.sflag [#allocation6], 1
    %376 = vsyncpa %s375, 1
    %377 = vsyncpa [#allocation4], 1
    %s378 = scalar_lea.sflag [#allocation4], 1
    %379 = vsyncpa %s378, 1

</llo_original>
